<compile_context>
chip_gen: v6e
topology: v6e:2x2x1
jax: 0.10.0
libtpu: 0.0.40
codegen_flags: <defaults>
</compile_context>

<pallas_src>
import jax
import jax.numpy as jnp
from jax.experimental import pallas as pl
from jax.experimental.pallas import tpu as pltpu

HIDDEN = 256
ACT_DIM = 2
OUT_W = 2 * ACT_DIM      # 4 real output columns: [mu0, mu1, ls0, ls1]
HEAD_PAD = 128           # fused-head matmul width (MXU-friendly); only 0:4 stored
MIN_LOG_STD = -10.0
MAX_LOG_STD = 2.0


def actor_kernel(x_ref, w1_ref, b1_ref, w2_ref, b2_ref, wh_ref, bh_ref,
                 out_ref):
    # x arrives as f32; cast to bf16 on the VPU (avoids a wrapper HBM pass).
    x = x_ref[...].astype(jnp.bfloat16)

    # fc1 + relu  (bf16 operands, f32 accumulation)
    h = jnp.dot(x, w1_ref[...], preferred_element_type=jnp.float32) + b1_ref[...]
    h = jnp.maximum(h, 0.0)

    # fc2 + relu
    h = jnp.dot(h.astype(jnp.bfloat16), w2_ref[...],
                preferred_element_type=jnp.float32) + b2_ref[...]
    h = jnp.maximum(h, 0.0)

    # fused heads: columns [0:2] = mu, [2:4] = log_std, rest zero padding.
    y = jnp.dot(h.astype(jnp.bfloat16), wh_ref[...],
                preferred_element_type=jnp.float32) + bh_ref[...]

    # Keep only the 4 real columns; relu-then-clamp the log_std pair
    # (matches the PyTorch forward exactly), pass mu through untouched.
    y4 = y[:, :OUT_W]
    col = jax.lax.broadcasted_iota(jnp.int32, y4.shape, 1)
    ls = jnp.clip(jnp.maximum(y4, 0.0), MIN_LOG_STD, MAX_LOG_STD)
    out_ref[...] = jnp.where(col >= ACT_DIM, ls, y4).astype(out_ref.dtype)


def prepare_actor_params(params):
    """Convert nn.Linear-style f32 params to the fused/padded bf16 kernel layout."""
    w1, b1, w2, b2, wmu, bmu, wls, bls = params
    wh = jnp.zeros((HIDDEN, HEAD_PAD), jnp.float32)
    wh = wh.at[:, :ACT_DIM].set(wmu).at[:, ACT_DIM:OUT_W].set(wls)
    bh = jnp.zeros((1, HEAD_PAD), jnp.float32)
    bh = bh.at[:, :ACT_DIM].set(bmu).at[:, ACT_DIM:OUT_W].set(bls)
    return (w1.astype(jnp.bfloat16), b1,
            w2.astype(jnp.bfloat16), b2,
            wh.astype(jnp.bfloat16), bh)


def _choose_tb(B, target=1024):
    """Pick the batch tile.

    * Big enough to amortize the ~0.35 us per-grid-step pipeline overhead.
    * >= 2 grid steps whenever B allows it, so a 'parallel' batch axis spans
      both TensorCores on v7x.
    * Multiple of 8 (sublane) so the BlockSpec satisfies the (8, 128) rule
      even when it does not equal the full batch.
    """
    round8 = lambda n: -(-n // 8) * 8
    if B <= 512:
        return round8(B)                       # single small tile
    tb = min(target, round8(-(-B // 2)))        # ~B/2 -> >= 2 grid steps
    return max(256, (tb // 256) * 256)          # MXU-friendly multiple of 256


def actor_forward(x, kernel_params, *, tb=None):
    """Actor forward as a single fused Pallas kernel, tiled over the batch.

    x: f32 (B, state_dim).  Returns (mu, log_std), each f32 (B, 2).
    Note: matmul operands are bf16 with f32 accumulation (SAC-appropriate).
    """
    B, S = x.shape
    w1, b1, w2, b2, wh, bh = kernel_params
    if tb is None:
        tb = _choose_tb(B)
    grid = pl.cdiv(B, tb)    # ragged tail handled by Pallas block padding/masking

    full = lambda shape: pl.BlockSpec(shape, lambda i: (0, 0))

    grid_spec = pltpu.PrefetchScalarGridSpec(
        num_scalar_prefetch=0,
        grid=(grid,),
        in_specs=[
            pl.BlockSpec((tb, S), lambda i: (i, 0)),         # x tile (f32)
            full((S, HIDDEN)), full((1, HIDDEN)),            # fc1
            full((HIDDEN, HIDDEN)), full((1, HIDDEN)),       # fc2
            full((HIDDEN, HEAD_PAD)), full((1, HEAD_PAD)),   # fused heads
        ],
        out_specs=pl.BlockSpec((tb, OUT_W), lambda i: (i, 0)),
    )

    out = pl.pallas_call(
        actor_kernel,
        out_shape=jax.ShapeDtypeStruct((B, OUT_W), jnp.float32),
        grid_spec=grid_spec,
        compiler_params=pltpu.CompilerParams(
            dimension_semantics=("parallel",)),
    )(x, w1, b1, w2, b2, wh, bh)

    mu = out[:, :ACT_DIM]
    log_std = out[:, ACT_DIM:OUT_W]
    return mu, log_std


def init_actor_params(key, state_dim):
    """Deterministic init mimicking nn.Linear's U(-1/sqrt(fan_in), 1/sqrt(fan_in))."""
    def linear(k, fan_in, fan_out):
        kw, kb = jax.random.split(k)
        bound = 1.0 / jnp.sqrt(fan_in)
        w = jax.random.uniform(kw, (fan_in, fan_out), jnp.float32, -bound, bound)
        b = jax.random.uniform(kb, (1, fan_out), jnp.float32, -bound, bound)
        return w, b

    k1, k2, k3, k4 = jax.random.split(key, 4)
    w1, b1 = linear(k1, state_dim, HIDDEN)
    w2, b2 = linear(k2, HIDDEN, HIDDEN)
    wmu, bmu = linear(k3, HIDDEN, ACT_DIM)
    wls, bls = linear(k4, HIDDEN, ACT_DIM)
    return (w1, b1, w2, b2, wmu, bmu, wls, bls)


def actor_reference_f32(x, params):
    """Pure-JAX f32 reference of the PyTorch forward (semantic ground truth)."""
    w1, b1, w2, b2, wmu, bmu, wls, bls = params
    h = jax.nn.relu(x @ w1 + b1)
    h = jax.nn.relu(h @ w2 + b2)
    mu = h @ wmu + bmu
    # NOTE: the PyTorch module really does relu-then-clamp on log_std, so the
    # -10 lower bound is dead code; we preserve that semantics exactly.
    ls = jnp.clip(jax.nn.relu(h @ wls + bls), MIN_LOG_STD, MAX_LOG_STD)
    return mu, ls


def actor_reference_bf16(x, params):
    """Pure-JAX reference with the same bf16-operand / f32-accumulate casts."""
    w1, b1, w2, b2, wmu, bmu, wls, bls = params
    f32, bf = jnp.float32, jnp.bfloat16
    h = jax.nn.relu(jnp.dot(x.astype(bf), w1.astype(bf),
                            preferred_element_type=f32) + b1)
    h = jax.nn.relu(jnp.dot(h.astype(bf), w2.astype(bf),
                            preferred_element_type=f32) + b2)
    h16 = h.astype(bf)
    mu = jnp.dot(h16, wmu.astype(bf), preferred_element_type=f32) + bmu
    ls = jnp.clip(jax.nn.relu(
        jnp.dot(h16, wls.astype(bf), preferred_element_type=f32) + bls),
        MIN_LOG_STD, MAX_LOG_STD)
    return mu, ls


if __name__ == "__main__":
    key = jax.random.PRNGKey(0)
    k_params, k_x = jax.random.split(key)

    batch = 8
    state_dim = 16

    params = init_actor_params(k_params, state_dim)
    kernel_params = prepare_actor_params(params)
    x = jax.random.normal(k_x, (batch, state_dim), jnp.float32)

    mu, log_std = actor_forward(x, kernel_params)
    jax.block_until_ready((mu, log_std))

    assert mu.shape == (batch, ACT_DIM) and log_std.shape == (batch, ACT_DIM)

    # Tight check vs. a reference using identical bf16-operand casts.
    mu_bf, ls_bf = actor_reference_bf16(x, params)
    assert jnp.allclose(mu, mu_bf, atol=2e-3, rtol=2e-3), "mu mismatch (bf16 ref)"
    assert jnp.allclose(log_std, ls_bf, atol=2e-3, rtol=2e-3), "log_std mismatch (bf16 ref)"

    # Loose semantic check vs. the full-f32 PyTorch-equivalent forward.
    mu_f32, ls_f32 = actor_reference_f32(x, params)
    assert jnp.allclose(mu, mu_f32, atol=5e-2, rtol=5e-2), "mu mismatch (f32 ref)"
    assert jnp.allclose(log_std, ls_f32, atol=5e-2, rtol=5e-2), "log_std mismatch (f32 ref)"

    # Exercise a ragged, multi-tile batch path too (no wrapper padding needed).
    xb = jax.random.normal(k_x, (1037, state_dim), jnp.float32)
    mu_b, ls_b = actor_forward(xb, kernel_params, tb=512)
    jax.block_until_ready((mu_b, ls_b))
    mu_b_ref, ls_b_ref = actor_reference_bf16(xb, params)
    assert jnp.allclose(mu_b, mu_b_ref, atol=2e-3, rtol=2e-3), "ragged mu mismatch"
    assert jnp.allclose(ls_b, ls_b_ref, atol=2e-3, rtol=2e-3), "ragged log_std mismatch"

    print("KERNEL_OK")
</pallas_src>

<mosaic_0001>
module attributes {stable_mosaic.version = 11 : i64} {
  func.func @actor_kernel(%arg0: i32, %arg1: memref<8x16xf32, #tpu.memory_space<vmem>>, %arg2: memref<16x256xbf16, #tpu.memory_space<vmem>>, %arg3: memref<1x256xf32, #tpu.memory_space<vmem>>, %arg4: memref<256x256xbf16, #tpu.memory_space<vmem>>, %arg5: memref<1x256xf32, #tpu.memory_space<vmem>>, %arg6: memref<256x128xbf16, #tpu.memory_space<vmem>>, %arg7: memref<1x128xf32, #tpu.memory_space<vmem>>, %arg8: memref<8x4xf32, #tpu.memory_space<vmem>>) attributes {dimension_semantics = [#tpu.dimension_semantics<parallel>], iteration_bounds = array<i64: 1>, scalar_prefetch = 0 : i64, scratch_operands = 0 : i64, tpu.core_type = #tpu.core_type<tc>, window_params = [{transform_indices = @transform_0, window_bounds = array<i64: 8, 16>}, {pipeline_mode = #tpu.pipeline_mode<synchronous>, transform_indices = @transform_1, window_bounds = array<i64: 16, 256>}, {pipeline_mode = #tpu.pipeline_mode<synchronous>, transform_indices = @transform_2, window_bounds = array<i64: 1, 256>}, {pipeline_mode = #tpu.pipeline_mode<synchronous>, transform_indices = @transform_3, window_bounds = array<i64: 256, 256>}, {pipeline_mode = #tpu.pipeline_mode<synchronous>, transform_indices = @transform_4, window_bounds = array<i64: 1, 256>}, {pipeline_mode = #tpu.pipeline_mode<synchronous>, transform_indices = @transform_5, window_bounds = array<i64: 256, 128>}, {pipeline_mode = #tpu.pipeline_mode<synchronous>, transform_indices = @transform_6, window_bounds = array<i64: 1, 128>}, {transform_indices = @transform_7, window_bounds = array<i64: 8, 4>}]} {
    %c0 = arith.constant 0 : index
    %c0_0 = arith.constant 0 : index
    %0 = vector.load %arg1[%c0, %c0_0] : memref<8x16xf32, #tpu.memory_space<vmem>>, vector<8x16xf32>
    %1 = arith.truncf %0 : vector<8x16xf32> to vector<8x16xbf16>
    %c0_1 = arith.constant 0 : index
    %c0_2 = arith.constant 0 : index
    %2 = vector.load %arg2[%c0_1, %c0_2] : memref<16x256xbf16, #tpu.memory_space<vmem>>, vector<16x256xbf16>
    %cst = arith.constant dense<0.000000e+00> : vector<8x256xf32>
    %3 = tpu.matmul %1, %2, %cst {dimension_numbers = #tpu.dot_dimension_numbers<[1], [0], [0], [1], [0, 0, 1, 1], [], []>} : vector<8x16xbf16>, vector<16x256xbf16>, vector<8x256xf32> -> vector<8x256xf32>
    %c0_3 = arith.constant 0 : index
    %c0_4 = arith.constant 0 : index
    %4 = vector.load %arg3[%c0_3, %c0_4] : memref<1x256xf32, #tpu.memory_space<vmem>>, vector<1x256xf32>
    %5 = vector.broadcast %4 : vector<1x256xf32> to vector<8x256xf32>
    %6 = arith.addf %3, %5 : vector<8x256xf32>
    %cst_5 = arith.constant 0.000000e+00 : f32
    %7 = vector.broadcast %cst_5 : f32 to vector<8x256xf32>
    %8 = arith.maximumf %6, %7 : vector<8x256xf32>
    %9 = arith.truncf %8 : vector<8x256xf32> to vector<8x256xbf16>
    %c0_6 = arith.constant 0 : index
    %c0_7 = arith.constant 0 : index
    %10 = vector.load %arg4[%c0_6, %c0_7] : memref<256x256xbf16, #tpu.memory_space<vmem>>, vector<256x256xbf16>
    %cst_8 = arith.constant dense<0.000000e+00> : vector<8x256xf32>
    %11 = tpu.matmul %9, %10, %cst_8 {dimension_numbers = #tpu.dot_dimension_numbers<[1], [0], [0], [1], [0, 0, 1, 1], [], []>} : vector<8x256xbf16>, vector<256x256xbf16>, vector<8x256xf32> -> vector<8x256xf32>
    %c0_9 = arith.constant 0 : index
    %c0_10 = arith.constant 0 : index
    %12 = vector.load %arg5[%c0_9, %c0_10] : memref<1x256xf32, #tpu.memory_space<vmem>>, vector<1x256xf32>
    %13 = vector.broadcast %12 : vector<1x256xf32> to vector<8x256xf32>
    %14 = arith.addf %11, %13 : vector<8x256xf32>
    %cst_11 = arith.constant 0.000000e+00 : f32
    %15 = vector.broadcast %cst_11 : f32 to vector<8x256xf32>
    %16 = arith.maximumf %14, %15 : vector<8x256xf32>
    %17 = arith.truncf %16 : vector<8x256xf32> to vector<8x256xbf16>
    %c0_12 = arith.constant 0 : index
    %c0_13 = arith.constant 0 : index
    %18 = vector.load %arg6[%c0_12, %c0_13] : memref<256x128xbf16, #tpu.memory_space<vmem>>, vector<256x128xbf16>
    %cst_14 = arith.constant dense<0.000000e+00> : vector<8x128xf32>
    %19 = tpu.matmul %17, %18, %cst_14 {dimension_numbers = #tpu.dot_dimension_numbers<[1], [0], [0], [1], [0, 0, 1, 1], [], []>} : vector<8x256xbf16>, vector<256x128xbf16>, vector<8x128xf32> -> vector<8x128xf32>
    %c0_15 = arith.constant 0 : index
    %c0_16 = arith.constant 0 : index
    %20 = vector.load %arg7[%c0_15, %c0_16] : memref<1x128xf32, #tpu.memory_space<vmem>>, vector<1x128xf32>
    %21 = vector.broadcast %20 : vector<1x128xf32> to vector<8x128xf32>
    %22 = arith.addf %19, %21 : vector<8x128xf32>
    %23 = vector.extract_strided_slice %22 {offsets = [0, 0], sizes = [8, 4], strides = [1, 1]} : vector<8x128xf32> to vector<8x4xf32>
    %24 = tpu.iota {dimensions = array<i32: 1>} : vector<8x4xi32>
    %cst_17 = arith.constant 0.000000e+00 : f32
    %25 = vector.broadcast %cst_17 : f32 to vector<8x4xf32>
    %26 = arith.maximumf %23, %25 : vector<8x4xf32>
    %cst_18 = arith.constant -1.000000e+01 : f32
    %cst_19 = arith.constant 2.000000e+00 : f32
    %27 = vector.broadcast %cst_18 : f32 to vector<8x4xf32>
    %28 = arith.maximumf %27, %26 : vector<8x4xf32>
    %29 = vector.broadcast %cst_19 : f32 to vector<8x4xf32>
    %30 = arith.minimumf %29, %28 : vector<8x4xf32>
    %c2_i32 = arith.constant 2 : i32
    %31 = vector.broadcast %c2_i32 : i32 to vector<8x4xi32>
    %32 = arith.cmpi sge, %24, %31 : vector<8x4xi32>
    %33 = arith.select %32, %30, %23 : vector<8x4xi1>, vector<8x4xf32>
    %c0_20 = arith.constant 0 : index
    %c0_21 = arith.constant 0 : index
    %34 = vector.load %arg8[%c0_20, %c0_21] : memref<8x4xf32, #tpu.memory_space<vmem>>, vector<8x4xf32>
    tpu.vector_store %arg8[%c0_20, %c0_21], %33 {strides = array<i32>} : memref<8x4xf32, #tpu.memory_space<vmem>>, vector<8x4xf32>,
    return
  }
  func.func @transform_0(%arg0: i32) -> (i32, i32) {
    %c0_i32 = arith.constant 0 : i32
    %c0_i32_0 = arith.constant 0 : i32
    return %arg0, %c0_i32 : i32, i32
  }
  func.func @transform_1(%arg0: i32) -> (i32, i32) {
    %c0_i32 = arith.constant 0 : i32
    %c0_i32_0 = arith.constant 0 : i32
    %c0_i32_1 = arith.constant 0 : i32
    return %c0_i32, %c0_i32_0 : i32, i32
  }
  func.func @transform_2(%arg0: i32) -> (i32, i32) {
    %c0_i32 = arith.constant 0 : i32
    %c0_i32_0 = arith.constant 0 : i32
    %c0_i32_1 = arith.constant 0 : i32
    return %c0_i32, %c0_i32_0 : i32, i32
  }
  func.func @transform_3(%arg0: i32) -> (i32, i32) {
    %c0_i32 = arith.constant 0 : i32
    %c0_i32_0 = arith.constant 0 : i32
    %c0_i32_1 = arith.constant 0 : i32
    return %c0_i32, %c0_i32_0 : i32, i32
  }
  func.func @transform_4(%arg0: i32) -> (i32, i32) {
    %c0_i32 = arith.constant 0 : i32
    %c0_i32_0 = arith.constant 0 : i32
    %c0_i32_1 = arith.constant 0 : i32
    return %c0_i32, %c0_i32_0 : i32, i32
  }
  func.func @transform_5(%arg0: i32) -> (i32, i32) {
    %c0_i32 = arith.constant 0 : i32
    %c0_i32_0 = arith.constant 0 : i32
    %c0_i32_1 = arith.constant 0 : i32
    return %c0_i32, %c0_i32_0 : i32, i32
  }
  func.func @transform_6(%arg0: i32) -> (i32, i32) {
    %c0_i32 = arith.constant 0 : i32
    %c0_i32_0 = arith.constant 0 : i32
    %c0_i32_1 = arith.constant 0 : i32
    return %c0_i32, %c0_i32_0 : i32, i32
  }
  func.func @transform_7(%arg0: i32) -> (i32, i32) {
    %c0_i32 = arith.constant 0 : i32
    %c0_i32_0 = arith.constant 0 : i32
    return %arg0, %c0_i32 : i32, i32
  }
}

</mosaic_0001>

<llo_original>
// kernel: tpu_custom_call.1
$region0: #{tpu_custom_call.1}
  #allocation0 [shape = 'u32[]', space=smem, size = 0x4, offset = 0x4, fixed_abs, tag = 'smem constant byte address 0x4 - core index']
  #allocation1 [shape = 'u32[144,128]{1,0:T(1,128)}', space=vmem, size = 0x12000, scoped, tag = 'internal scratch']
  %s0 = inlined_call_operand.hbm [shape: f32[8,16], index: 0, kind: input, shape index: {}]
  %s1 = inlined_call_operand.hbm [shape: bf16[16,256], index: 1, kind: input, shape index: {}]
  %s2 = inlined_call_operand.vmem [shape: f32[1,256], index: 2, kind: input, shape index: {}]
  %s3 = inlined_call_operand.hbm [shape: bf16[256,256], index: 3, kind: input, shape index: {}]
  %s4 = inlined_call_operand.vmem [shape: f32[1,256], index: 4, kind: input, shape index: {}]
  %s5 = inlined_call_operand.hbm [shape: bf16[256,128], index: 5, kind: input, shape index: {}]
  %s6 = inlined_call_operand.vmem [shape: f32[1,128], index: 6, kind: input, shape index: {}]
  %s7 = inlined_call_operand.vmem [shape: f32[8,4], index: 7, kind: output, shape index: {}]
  %s8 = sld [smem:[#allocation0]]
  $region54: #{tpu_custom_call.1} parent=0
    _
  %s10 = ssub.s32 1, %s8
  %s11 = scalar_select 0, %s10, %s8
  $region1: #{tpu_custom_call.1} parent=0
    #allocation2 [shape = 'u8[4096]{0}', space=vmem, size = 0x1000, scoped, tag = 'input window, operand 0, single buffered']
    #allocation3 [shape = 's32[1]{0}', space=sflag, size = 0x4, scoped, tag = 'scoped memory for tpu_custom_call.1']
    #allocation4 [shape = 'u8[8192]{0}', space=vmem, size = 0x2000, scoped, tag = 'input window, operand 1, single buffered']
    #allocation5 [shape = 's32[1]{0}', space=sflag, size = 0x4, scoped, tag = 'scoped memory for tpu_custom_call.1']
    #allocation6 [shape = 'u8[131072]{0}', space=vmem, size = 0x20000, scoped, tag = 'input window, operand 3, single buffered']
    #allocation7 [shape = 'u8[65536]{0}', space=vmem, size = 0x10000, scoped, tag = 'input window, operand 5, single buffered']
    #allocation8 [shape = 's32[1]{0}', space=sflag, size = 0x4, scoped, tag = 'scoped memory for tpu_custom_call.1']
    %12 = vsyncpa [#allocation3], 0
    %13 = vsyncpa [#allocation5], 0
    %14 = vsyncpa [#allocation8], 0
    // Predicated region
    $region2: #{tpu_custom_call.1} parent=1 // pred_check
      _
    $region3: #{tpu_custom_call.1} parent=1 // pred_check_branch
      %16 = sbr.rel (0) target = $region5
    $region4: #{tpu_custom_call.1} parent=1 // pred_region
      %s18 = ssub.s32 128, 128
      %19 = vsyncadd [#allocation3], %s18
      %s21 = sshll.u32 [#allocation2], 4
      %s22 = int_to_ptr.vmem [resolvable:$true] %s21
      %24 = dma.hbm_to_vmem [thread:$0]  %s0, 128, %s22, [#allocation3]
    $region5: #{tpu_custom_call.1} parent=1 // pred_fallthru
      _
    // Predicated region
    $region6: #{tpu_custom_call.1} parent=1 // pred_check
      _
    $region7: #{tpu_custom_call.1} parent=1 // pred_check_branch
      %26 = sbr.rel (0) target = $region9
    $region8: #{tpu_custom_call.1} parent=1 // pred_region
      %s28 = ssub.s32 256, 256
      %29 = vsyncadd [#allocation5], %s28
      %s30 = sshll.u32 [#allocation4], 4
      %s31 = int_to_ptr.vmem [resolvable:$true] %s30
      %36 = dma.hbm_to_vmem [thread:$0]  %s1, 256, %s31, [#allocation5], 128, 128, 8
    $region9: #{tpu_custom_call.1} parent=1 // pred_fallthru
      _
    // Predicated region
    $region10: #{tpu_custom_call.1} parent=1 // pred_check
      _
    $region11: #{tpu_custom_call.1} parent=1 // pred_check_branch
      %38 = sbr.rel (0) target = $region13
    $region12: #{tpu_custom_call.1} parent=1 // pred_region
      _
    $region13: #{tpu_custom_call.1} parent=1 // pred_fallthru
      _
    // Predicated region
    $region14: #{tpu_custom_call.1} parent=1 // pred_check
      _
    $region15: #{tpu_custom_call.1} parent=1 // pred_check_branch
      %40 = sbr.rel (0) target = $region17
    $region16: #{tpu_custom_call.1} parent=1 // pred_region
      %s42 = ssub.s32 4096, 4096
      %43 = vsyncadd [#allocation5], %s42
      %s44 = sshll.u32 [#allocation6], 4
      %s45 = int_to_ptr.vmem [resolvable:$true] %s44
      %50 = dma.hbm_to_vmem [thread:$0]  %s3, 4096, %s45, [#allocation5], 128, 128, 8
    $region17: #{tpu_custom_call.1} parent=1 // pred_fallthru
      _
    // Predicated region
    $region18: #{tpu_custom_call.1} parent=1 // pred_check
      _
    $region19: #{tpu_custom_call.1} parent=1 // pred_check_branch
      %52 = sbr.rel (0) target = $region21
    $region20: #{tpu_custom_call.1} parent=1 // pred_region
      _
    $region21: #{tpu_custom_call.1} parent=1 // pred_fallthru
      _
    // Predicated region
    $region22: #{tpu_custom_call.1} parent=1 // pred_check
      _
    $region23: #{tpu_custom_call.1} parent=1 // pred_check_branch
      %54 = sbr.rel (0) target = $region25
    $region24: #{tpu_custom_call.1} parent=1 // pred_region
      %s56 = ssub.s32 2048, 2048
      %57 = vsyncadd [#allocation8], %s56
      %s58 = sshll.u32 [#allocation7], 4
      %s59 = int_to_ptr.vmem [resolvable:$true] %s58
      %64 = dma.hbm_to_vmem [thread:$0]  %s5, 2048, %s59, [#allocation8], 64, 64, 4
    $region25: #{tpu_custom_call.1} parent=1 // pred_fallthru
      _
    // Predicated region
    $region26: #{tpu_custom_call.1} parent=1 // pred_check
      _
    $region27: #{tpu_custom_call.1} parent=1 // pred_check_branch
      %66 = sbr.rel (0) target = $region29
    $region28: #{tpu_custom_call.1} parent=1 // pred_region
      _
    $region29: #{tpu_custom_call.1} parent=1 // pred_fallthru
      _
    // Predicated region
    $region30: #{tpu_custom_call.1} parent=1 // pred_check
      _
    $region31: #{tpu_custom_call.1} parent=1 // pred_check_branch
      %68 = sbr.rel (0) target = $region33
    $region32: #{tpu_custom_call.1} parent=1 // pred_region
      %69 = dma.done [#allocation3], 128
    $region33: #{tpu_custom_call.1} parent=1 // pred_fallthru
      _
    // Predicated region
    $region34: #{tpu_custom_call.1} parent=1 // pred_check
      _
    $region35: #{tpu_custom_call.1} parent=1 // pred_check_branch
      %71 = sbr.rel (0) target = $region37
    $region36: #{tpu_custom_call.1} parent=1 // pred_region
      %72 = dma.done [#allocation5], 256
    $region37: #{tpu_custom_call.1} parent=1 // pred_fallthru
      _
    // Predicated region
    $region38: #{tpu_custom_call.1} parent=1 // pred_check
      _
    $region39: #{tpu_custom_call.1} parent=1 // pred_check_branch
      %74 = sbr.rel (0) target = $region41
    $region40: #{tpu_custom_call.1} parent=1 // pred_region
      %75 = dma.done [#allocation5], 4096
    $region41: #{tpu_custom_call.1} parent=1 // pred_fallthru
      _
    // Predicated region
    $region42: #{tpu_custom_call.1} parent=1 // pred_check
      _
    $region43: #{tpu_custom_call.1} parent=1 // pred_check_branch
      %77 = sbr.rel (0) target = $region45
    $region44: #{tpu_custom_call.1} parent=1 // pred_region
      %78 = dma.done [#allocation8], 2048
    $region45: #{tpu_custom_call.1} parent=1 // pred_fallthru
      _
    %v80 = vld [vmem:[#allocation2] sm:$0xff]
    %v81 = vpack.c.bf16 %v80, %v80
    %v82 = vld [vmem:[#allocation4] sm:$0xff]
    %v83 = vld [vmem:[#allocation4 + $0x8] sm:$0xff]
    %v84 = vld [vmem:[%s2] sm:$0x3]
    %v86 = vlaneseq
    %v87 = vshrl.u32 %v86, 7
    %v88 = vsub.s32 0, %v87
    %v89 = vrot.slane %v84, %v88
    %v90 = vlaneseq
    %v91 = vshrl.u32 %v90, 7
    %v92 = vsub.s32 1, %v91
    %v93 = vrot.slane %v84, %v92
    %v98 = vunpack.c.l.b16 %v82
    %v99 = vunpack.c.h.b16 %v82
    %v100 = vunpack.c.l.b16 %v83
    %v101 = vunpack.c.h.b16 %v83
    %v102 = vpack.c.b16 %v100, %v98
    %v103 = vpack.c.b16 %v101, %v99
    %vm106 = vcmask 130048
    %v108 = vsel %vm106, %v81, 0
    %110 = vmatprep.subr.bf16.mxu0 0
    %111 = vmatpush1.bf16.msra.mxu0 0
    %112 = vmatprep.subr.bf16.mxu0 0
    %113 = vmatpush1.bf16.msra.mxu0 0
    %114 = vmatprep.subr.bf16.mxu0 0
    %115 = vmatpush1.bf16.msra.mxu0 0
    %116 = vmatprep.subr.bf16.mxu0 0
    %117 = vmatpush1.bf16.msra.mxu0 0
    %118 = vmatprep.subr.bf16.mxu0 0
    %119 = vmatpush1.bf16.msra.mxu0 0
    %120 = vmatprep.subr.bf16.mxu0 0
    %121 = vmatpush1.bf16.msra.mxu0 0
    %122 = vmatprep.subr.bf16.mxu0 0
    %123 = vmatpush1.bf16.msra.mxu0 0
    %124 = vmatprep.subr.bf16.mxu0 %v103
    %125 = vmatpush1.bf16.msra.mxu0 %v102
    %126 = vmatprep.subr.bf16.mxu0 0
    %127 = vmatpush2.bf16.msra.mxu0 0
    %128 = vmatprep.subr.bf16.mxu0 0
    %129 = vmatpush2.bf16.msra.mxu0 0
    %130 = vmatprep.subr.bf16.mxu0 0
    %131 = vmatpush2.bf16.msra.mxu0 0
    %132 = vmatprep.subr.bf16.mxu0 0
    %133 = vmatpush2.bf16.msra.mxu0 0
    %134 = vmatprep.subr.bf16.mxu0 0
    %135 = vmatpush2.bf16.msra.mxu0 0
    %136 = vmatprep.subr.bf16.mxu0 0
    %137 = vmatpush2.bf16.msra.mxu0 0
    %138 = vmatprep.subr.bf16.mxu0 0
    %139 = vmatpush2.bf16.msra.mxu0 0
    %140 = vmatprep.subr.bf16.mxu0 0
    %141 = vmatpush2.bf16.msra.mxu0 0
    %142 = vmatprep.mubr.bf16.mxu0 0
    %143 = vmatmul.mubr.bf16.gmra.mxu0 %v108
    %v144 = vpop.f32.mrf.mxu0
    %v145 = vadd.f32 %v89, %v144
    %v146 = vpop.f32.mrf.mxu0
    %v147 = vadd.f32 %v93, %v146
    %v148 = vpop.f32.mrf.mxu0
    %v149 = vpop.f32.mrf.mxu0
    %150 = vdwg.mxu0
    %v151 = vmax.f32 %v145, 0.0
    %v152 = vmax.f32 %v147, 0.0
    %v153 = vpack.c.bf16 %v151, %v151
    %v154 = vpack.c.bf16 %v152, %v152
    %v155 = vld [vmem:[#allocation6] sm:$0xff]
    %v156 = vld [vmem:[#allocation6 + $0x8] sm:$0xff]
    %v157 = vld [vmem:[#allocation6 + $0x10] sm:$0xff]
    %v158 = vld [vmem:[#allocation6 + $0x18] sm:$0xff]
    %v159 = vld [vmem:[#allocation6 + $0x20] sm:$0xff]
    %v160 = vld [vmem:[#allocation6 + $0x28] sm:$0xff]
    %v161 = vld [vmem:[#allocation6 + $0x30] sm:$0xff]
    %v162 = vld [vmem:[#allocation6 + $0x38] sm:$0xff]
    %v163 = vld [vmem:[#allocation6 + $0x40] sm:$0xff]
    %v164 = vld [vmem:[#allocation6 + $0x48] sm:$0xff]
    %v165 = vld [vmem:[#allocation6 + $0x50] sm:$0xff]
    %v166 = vld [vmem:[#allocation6 + $0x58] sm:$0xff]
    %v167 = vld [vmem:[#allocation6 + $0x60] sm:$0xff]
    %v168 = vld [vmem:[#allocation6 + $0x68] sm:$0xff]
    %v169 = vld [vmem:[#allocation6 + $0x70] sm:$0xff]
    %v170 = vld [vmem:[#allocation6 + $0x78] sm:$0xff]
    %v171 = vld [vmem:[#allocation6 + $0x80] sm:$0xff]
    %v172 = vld [vmem:[#allocation6 + $0x88] sm:$0xff]
    %v173 = vld [vmem:[#allocation6 + $0x90] sm:$0xff]
    %v174 = vld [vmem:[#allocation6 + $0x98] sm:$0xff]
    %v175 = vld [vmem:[#allocation6 + $0xa0] sm:$0xff]
    %v176 = vld [vmem:[#allocation6 + $0xa8] sm:$0xff]
    %v177 = vld [vmem:[#allocation6 + $0xb0] sm:$0xff]
    %v178 = vld [vmem:[#allocation6 + $0xb8] sm:$0xff]
    %v179 = vld [vmem:[#allocation6 + $0xc0] sm:$0xff]
    %v180 = vld [vmem:[#allocation6 + $0xc8] sm:$0xff]
    %v181 = vld [vmem:[#allocation6 + $0xd0] sm:$0xff]
    %v182 = vld [vmem:[#allocation6 + $0xd8] sm:$0xff]
    %v183 = vld [vmem:[#allocation6 + $0xe0] sm:$0xff]
    %v184 = vld [vmem:[#allocation6 + $0xe8] sm:$0xff]
    %v185 = vld [vmem:[#allocation6 + $0xf0] sm:$0xff]
    %v186 = vld [vmem:[#allocation6 + $0xf8] sm:$0xff]
    %v187 = vld [vmem:[%s4] sm:$0x3]
    %v189 = vlaneseq
    %v190 = vshrl.u32 %v189, 7
    %v191 = vsub.s32 0, %v190
    %v192 = vrot.slane %v187, %v191
    %v193 = vlaneseq
    %v194 = vshrl.u32 %v193, 7
    %v195 = vsub.s32 1, %v194
    %v196 = vrot.slane %v187, %v195
    %v231 = vunpack.c.l.b16 %v155
    %v232 = vunpack.c.h.b16 %v155
    %v233 = vunpack.c.l.b16 %v156
    %v234 = vunpack.c.h.b16 %v156
    %v235 = vunpack.c.l.b16 %v157
    %v236 = vunpack.c.h.b16 %v157
    %v237 = vunpack.c.l.b16 %v158
    %v238 = vunpack.c.h.b16 %v158
    %v239 = vunpack.c.l.b16 %v159
    %v240 = vunpack.c.h.b16 %v159
    %v241 = vunpack.c.l.b16 %v160
    %v242 = vunpack.c.h.b16 %v160
    %v243 = vunpack.c.l.b16 %v161
    %v244 = vunpack.c.h.b16 %v161
    %v245 = vunpack.c.l.b16 %v162
    %v246 = vunpack.c.h.b16 %v162
    %v247 = vunpack.c.l.b16 %v163
    %v248 = vunpack.c.h.b16 %v163
    %v249 = vunpack.c.l.b16 %v164
    %v250 = vunpack.c.h.b16 %v164
    %v251 = vunpack.c.l.b16 %v165
    %v252 = vunpack.c.h.b16 %v165
    %v253 = vunpack.c.l.b16 %v166
    %v254 = vunpack.c.h.b16 %v166
    %v255 = vunpack.c.l.b16 %v167
    %v256 = vunpack.c.h.b16 %v167
    %v257 = vunpack.c.l.b16 %v168
    %v258 = vunpack.c.h.b16 %v168
    %v259 = vunpack.c.l.b16 %v169
    %v260 = vunpack.c.h.b16 %v169
    %v261 = vunpack.c.l.b16 %v170
    %v262 = vunpack.c.h.b16 %v170
    %v263 = vunpack.c.l.b16 %v171
    %v264 = vunpack.c.h.b16 %v171
    %v265 = vunpack.c.l.b16 %v172
    %v266 = vunpack.c.h.b16 %v172
    %v267 = vunpack.c.l.b16 %v173
    %v268 = vunpack.c.h.b16 %v173
    %v269 = vunpack.c.l.b16 %v174
    %v270 = vunpack.c.h.b16 %v174
    %v271 = vunpack.c.l.b16 %v175
    %v272 = vunpack.c.h.b16 %v175
    %v273 = vunpack.c.l.b16 %v176
    %v274 = vunpack.c.h.b16 %v176
    %v275 = vunpack.c.l.b16 %v177
    %v276 = vunpack.c.h.b16 %v177
    %v277 = vunpack.c.l.b16 %v178
    %v278 = vunpack.c.h.b16 %v178
    %v279 = vunpack.c.l.b16 %v179
    %v280 = vunpack.c.h.b16 %v179
    %v281 = vunpack.c.l.b16 %v180
    %v282 = vunpack.c.h.b16 %v180
    %v283 = vunpack.c.l.b16 %v181
    %v284 = vunpack.c.h.b16 %v181
    %v285 = vunpack.c.l.b16 %v182
    %v286 = vunpack.c.h.b16 %v182
    %v287 = vunpack.c.l.b16 %v183
    %v288 = vunpack.c.h.b16 %v183
    %v289 = vunpack.c.l.b16 %v184
    %v290 = vunpack.c.h.b16 %v184
    %v291 = vunpack.c.l.b16 %v185
    %v292 = vunpack.c.h.b16 %v185
    %v293 = vunpack.c.l.b16 %v186
    %v294 = vunpack.c.h.b16 %v186
    %v295 = vpack.c.b16 %v233, %v231
    %v296 = vpack.c.b16 %v234, %v232
    %v297 = vpack.c.b16 %v237, %v235
    %v298 = vpack.c.b16 %v238, %v236
    %v299 = vpack.c.b16 %v241, %v239
    %v300 = vpack.c.b16 %v242, %v240
    %v301 = vpack.c.b16 %v245, %v243
    %v302 = vpack.c.b16 %v246, %v244
    %v303 = vpack.c.b16 %v249, %v247
    %v304 = vpack.c.b16 %v250, %v248
    %v305 = vpack.c.b16 %v253, %v251
    %v306 = vpack.c.b16 %v254, %v252
    %v307 = vpack.c.b16 %v257, %v255
    %v308 = vpack.c.b16 %v258, %v256
    %v309 = vpack.c.b16 %v261, %v259
    %v310 = vpack.c.b16 %v262, %v260
    %v311 = vpack.c.b16 %v265, %v263
    %v312 = vpack.c.b16 %v266, %v264
    %v313 = vpack.c.b16 %v269, %v267
    %v314 = vpack.c.b16 %v270, %v268
    %v315 = vpack.c.b16 %v273, %v271
    %v316 = vpack.c.b16 %v274, %v272
    %v317 = vpack.c.b16 %v277, %v275
    %v318 = vpack.c.b16 %v278, %v276
    %v319 = vpack.c.b16 %v281, %v279
    %v320 = vpack.c.b16 %v282, %v280
    %v321 = vpack.c.b16 %v285, %v283
    %v322 = vpack.c.b16 %v286, %v284
    %v323 = vpack.c.b16 %v289, %v287
    %v324 = vpack.c.b16 %v290, %v288
    %v325 = vpack.c.b16 %v293, %v291
    %v326 = vpack.c.b16 %v294, %v292
    %359 = vmatprep.subr.bf16.mxu0 %v310
    %360 = vmatpush1.bf16.msra.mxu0 %v309
    %361 = vmatprep.subr.bf16.mxu0 %v308
    %362 = vmatpush1.bf16.msra.mxu0 %v307
    %363 = vmatprep.subr.bf16.mxu0 %v306
    %364 = vmatpush1.bf16.msra.mxu0 %v305
    %365 = vmatprep.subr.bf16.mxu0 %v304
    %366 = vmatpush1.bf16.msra.mxu0 %v303
    %367 = vmatprep.subr.bf16.mxu0 %v302
    %368 = vmatpush1.bf16.msra.mxu0 %v301
    %369 = vmatprep.subr.bf16.mxu0 %v300
    %370 = vmatpush1.bf16.msra.mxu0 %v299
    %371 = vmatprep.subr.bf16.mxu0 %v298
    %372 = vmatpush1.bf16.msra.mxu0 %v297
    %373 = vmatprep.subr.bf16.mxu0 %v296
    %374 = vmatpush1.bf16.msra.mxu0 %v295
    %375 = vmatprep.subr.bf16.mxu0 %v326
    %376 = vmatpush2.bf16.msra.mxu0 %v325
    %377 = vmatprep.subr.bf16.mxu0 %v324
    %378 = vmatpush2.bf16.msra.mxu0 %v323
    %379 = vmatprep.subr.bf16.mxu0 %v322
    %380 = vmatpush2.bf16.msra.mxu0 %v321
    %381 = vmatprep.subr.bf16.mxu0 %v320
    %382 = vmatpush2.bf16.msra.mxu0 %v319
    %383 = vmatprep.subr.bf16.mxu0 %v318
    %384 = vmatpush2.bf16.msra.mxu0 %v317
    %385 = vmatprep.subr.bf16.mxu0 %v316
    %386 = vmatpush2.bf16.msra.mxu0 %v315
    %387 = vmatprep.subr.bf16.mxu0 %v314
    %388 = vmatpush2.bf16.msra.mxu0 %v313
    %389 = vmatprep.subr.bf16.mxu0 %v312
    %390 = vmatpush2.bf16.msra.mxu0 %v311
    %391 = vmatprep.mubr.bf16.mxu0 %v154
    %392 = vmatmul.mubr.bf16.gmra.mxu0 %v153
    %v393 = vpop.f32.mrf.mxu0
    %v394 = vadd.f32 %v192, %v393
    %v395 = vpop.f32.mrf.mxu0
    %v396 = vadd.f32 %v196, %v395
    %v397 = vpop.f32.mrf.mxu0
    %v398 = vpop.f32.mrf.mxu0
    %399 = vdwg.mxu0
    %v400 = vmax.f32 %v394, 0.0
    %v401 = vmax.f32 %v396, 0.0
    %v402 = vpack.c.bf16 %v400, %v400
    %v403 = vpack.c.bf16 %v401, %v401
    %v404 = vld [vmem:[#allocation7] sm:$0xf]
    %v405 = vld [vmem:[#allocation7 + $0x4] sm:$0xf]
    %v406 = vld [vmem:[#allocation7 + $0x8] sm:$0xf]
    %v407 = vld [vmem:[#allocation7 + $0xc] sm:$0xf]
    %v408 = vld [vmem:[#allocation7 + $0x10] sm:$0xf]
    %v409 = vld [vmem:[#allocation7 + $0x14] sm:$0xf]
    %v410 = vld [vmem:[#allocation7 + $0x18] sm:$0xf]
    %v411 = vld [vmem:[#allocation7 + $0x1c] sm:$0xf]
    %v412 = vld [vmem:[#allocation7 + $0x20] sm:$0xf]
    %v413 = vld [vmem:[#allocation7 + $0x24] sm:$0xf]
    %v414 = vld [vmem:[#allocation7 + $0x28] sm:$0xf]
    %v415 = vld [vmem:[#allocation7 + $0x2c] sm:$0xf]
    %v416 = vld [vmem:[#allocation7 + $0x30] sm:$0xf]
    %v417 = vld [vmem:[#allocation7 + $0x34] sm:$0xf]
    %v418 = vld [vmem:[#allocation7 + $0x38] sm:$0xf]
    %v419 = vld [vmem:[#allocation7 + $0x3c] sm:$0xf]
    %v420 = vld [vmem:[#allocation7 + $0x40] sm:$0xf]
    %v421 = vld [vmem:[#allocation7 + $0x44] sm:$0xf]
    %v422 = vld [vmem:[#allocation7 + $0x48] sm:$0xf]
    %v423 = vld [vmem:[#allocation7 + $0x4c] sm:$0xf]
    %v424 = vld [vmem:[#allocation7 + $0x50] sm:$0xf]
    %v425 = vld [vmem:[#allocation7 + $0x54] sm:$0xf]
    %v426 = vld [vmem:[#allocation7 + $0x58] sm:$0xf]
    %v427 = vld [vmem:[#allocation7 + $0x5c] sm:$0xf]
    %v428 = vld [vmem:[#allocation7 + $0x60] sm:$0xf]
    %v429 = vld [vmem:[#allocation7 + $0x64] sm:$0xf]
    %v430 = vld [vmem:[#allocation7 + $0x68] sm:$0xf]
    %v431 = vld [vmem:[#allocation7 + $0x6c] sm:$0xf]
    %v432 = vld [vmem:[#allocation7 + $0x70] sm:$0xf]
    %v433 = vld [vmem:[#allocation7 + $0x74] sm:$0xf]
    %v434 = vld [vmem:[#allocation7 + $0x78] sm:$0xf]
    %v435 = vld [vmem:[#allocation7 + $0x7c] sm:$0xf]
    %v436 = vld [vmem:[%s6] sm:$0x1]
    %v438 = vlaneseq
    %v439 = vshrl.u32 %v438, 7
    %v440 = vsub.s32 0, %v439
    %v441 = vrot.slane %v436, %v440
    %v475 = vunpack.c.l.b16 %v404
    %v476 = vunpack.c.l.b16 %v405
    %v477 = vunpack.c.l.b16 %v406
    %v478 = vunpack.c.l.b16 %v407
    %v479 = vunpack.c.l.b16 %v408
    %v480 = vunpack.c.l.b16 %v409
    %v481 = vunpack.c.l.b16 %v410
    %v482 = vunpack.c.l.b16 %v411
    %v483 = vunpack.c.l.b16 %v412
    %v484 = vunpack.c.l.b16 %v413
    %v485 = vunpack.c.l.b16 %v414
    %v486 = vunpack.c.l.b16 %v415
    %v487 = vunpack.c.l.b16 %v416
    %v488 = vunpack.c.l.b16 %v417
    %v489 = vunpack.c.l.b16 %v418
    %v490 = vunpack.c.l.b16 %v419
    %v491 = vunpack.c.l.b16 %v420
    %v492 = vunpack.c.l.b16 %v421
    %v493 = vunpack.c.l.b16 %v422
    %v494 = vunpack.c.l.b16 %v423
    %v495 = vunpack.c.l.b16 %v424
    %v496 = vunpack.c.l.b16 %v425
    %v497 = vunpack.c.l.b16 %v426
    %v498 = vunpack.c.l.b16 %v427
    %v499 = vunpack.c.l.b16 %v428
    %v500 = vunpack.c.l.b16 %v429
    %v501 = vunpack.c.l.b16 %v430
    %v502 = vunpack.c.l.b16 %v431
    %v503 = vunpack.c.l.b16 %v432
    %v504 = vunpack.c.l.b16 %v433
    %v505 = vunpack.c.l.b16 %v434
    %v506 = vunpack.c.l.b16 %v435
    %v507 = vpack.c.b16 %v476, %v475
    %v508 = vpack.c.b16 %v478, %v477
    %v509 = vpack.c.b16 %v480, %v479
    %v510 = vpack.c.b16 %v482, %v481
    %v511 = vpack.c.b16 %v484, %v483
    %v512 = vpack.c.b16 %v486, %v485
    %v513 = vpack.c.b16 %v488, %v487
    %v514 = vpack.c.b16 %v490, %v489
    %v515 = vpack.c.b16 %v492, %v491
    %v516 = vpack.c.b16 %v494, %v493
    %v517 = vpack.c.b16 %v496, %v495
    %v518 = vpack.c.b16 %v498, %v497
    %v519 = vpack.c.b16 %v500, %v499
    %v520 = vpack.c.b16 %v502, %v501
    %v521 = vpack.c.b16 %v504, %v503
    %v522 = vpack.c.b16 %v506, %v505
    %539 = vmatprep.subr.bf16.mxu0 0
    %540 = vmatpush1.bf16.msra.mxu0 %v514
    %541 = vmatprep.subr.bf16.mxu0 0
    %542 = vmatpush1.bf16.msra.mxu0 %v513
    %543 = vmatprep.subr.bf16.mxu0 0
    %544 = vmatpush1.bf16.msra.mxu0 %v512
    %545 = vmatprep.subr.bf16.mxu0 0
    %546 = vmatpush1.bf16.msra.mxu0 %v511
    %547 = vmatprep.subr.bf16.mxu0 0
    %548 = vmatpush1.bf16.msra.mxu0 %v510
    %549 = vmatprep.subr.bf16.mxu0 0
    %550 = vmatpush1.bf16.msra.mxu0 %v509
    %551 = vmatprep.subr.bf16.mxu0 0
    %552 = vmatpush1.bf16.msra.mxu0 %v508
    %553 = vmatprep.subr.bf16.mxu0 0
    %554 = vmatpush1.bf16.msra.mxu0 %v507
    %555 = vmatprep.subr.bf16.mxu0 0
    %556 = vmatpush2.bf16.msra.mxu0 %v522
    %557 = vmatprep.subr.bf16.mxu0 0
    %558 = vmatpush2.bf16.msra.mxu0 %v521
    %559 = vmatprep.subr.bf16.mxu0 0
    %560 = vmatpush2.bf16.msra.mxu0 %v520
    %561 = vmatprep.subr.bf16.mxu0 0
    %562 = vmatpush2.bf16.msra.mxu0 %v519
    %563 = vmatprep.subr.bf16.mxu0 0
    %564 = vmatpush2.bf16.msra.mxu0 %v518
    %565 = vmatprep.subr.bf16.mxu0 0
    %566 = vmatpush2.bf16.msra.mxu0 %v517
    %567 = vmatprep.subr.bf16.mxu0 0
    %568 = vmatpush2.bf16.msra.mxu0 %v516
    %569 = vmatprep.subr.bf16.mxu0 0
    %570 = vmatpush2.bf16.msra.mxu0 %v515
    %571 = vmatprep.mubr.bf16.mxu0 %v403
    %572 = vmatmul.mubr.bf16.gmra.mxu0 %v402
    %v573 = vpop.f32.mrf.mxu0
    %v574 = vadd.f32 %v441, %v573
    %v575 = vpop.f32.mrf.mxu0
    %v576 = vpop.f32.mrf.mxu0
    %v577 = vpop.f32.mrf.mxu0
    %578 = vdwg.mxu0
    %v579 = vlaneseq
    %v580 = vand.u32 %v579, 127
    %v581 = vmax.f32 %v574, 0.0
    %v582 = vmax.f32 %v581, -10.0
    %v583 = vmin.f32 %v582, 2.0
    %vm584 = vcmp.ge.s32.totalorder %v580, 2
    %v585 = vsel %vm584, %v583, %v574
    %vm586 = vcmask 31744
    %587 = vst.msk [vmem:[%s7] sm:$0xff] %vm586, %v585
    // Predicated region
    $region46: #{tpu_custom_call.1} parent=1 // pred_check
      _
    $region47: #{tpu_custom_call.1} parent=1 // pred_check_branch
      %589 = sbr.rel (0) target = $region49
    $region48: #{tpu_custom_call.1} parent=1 // pred_region
      _
    $region49: #{tpu_custom_call.1} parent=1 // pred_fallthru
      _
    // Predicated region
    $region50: #{tpu_custom_call.1} parent=1 // pred_check
      _
    $region51: #{tpu_custom_call.1} parent=1 // pred_check_branch
      %591 = sbr.rel (0) target = $region53
    $region52: #{tpu_custom_call.1} parent=1 // pred_region
      _
    $region53: #{tpu_custom_call.1} parent=1 // pred_fallthru
      _
    %592 = vsyncpa [#allocation3], 1
    %593 = vsyncpa [#allocation5], 1
    %594 = vsyncpa [#allocation8], 1

</llo_original>
